<compile_context>
chip_gen: v7x
topology: tpu7x:2x2x1
jax: 0.10.0
libtpu: 0.0.40
codegen_flags: <defaults>
</compile_context>

<pallas_src>
import functools

import jax
import jax.numpy as jnp
from jax.experimental import pallas as pl
from jax.experimental.pallas import tpu as pltpu


def _round_up(v: int, m: int) -> int:
    return (v + m - 1) // m * m


def _make_layernorm_kernel(eps: float):
    def layernorm_kernel(x_ref, gamma_ref, o_ref):
        # x_ref / o_ref: (C, TS)  -- batch dim squeezed out by the BlockSpec.
        # Normalize over C (sublane axis) independently for each lane column.
        x = x_ref[...].astype(jnp.float32)
        mean = jnp.mean(x, axis=0, keepdims=True)                    # (1, TS)  XLU
        centered = x - mean
        var = jnp.mean(centered * centered, axis=0, keepdims=True)   # unbiased=False
        inv = jax.lax.rsqrt(var + eps)                               # EUP slot
        gamma = gamma_ref[...].astype(jnp.float32)                   # (C, 1)
        o_ref[...] = (centered * inv * gamma).astype(o_ref.dtype)

    return layernorm_kernel


@functools.partial(jax.jit, static_argnames=("eps",))
def layernorm(x, gamma, *, eps: float = 1e-5):
    """LayerNorm over the channel dim of a 'b c f h w' tensor (per-channel gamma)."""
    b, c, f, h, w = x.shape
    s = f * h * w

    # Free reshapes: channels -> sublane axis, merged (f h w) -> lane axis.
    x2 = x.reshape(b, c, s)
    g2 = gamma.reshape(c, 1)

    itemsize = x.dtype.itemsize
    # Lane-dense spatial tile (multiple of 128) targeting ~4 MiB input blocks,
    # capped so double-buffered in+out blocks plus ~3 f32 temporaries stay well
    # inside scoped VMEM on every generation (also correct for bf16 inputs).
    per_col_vmem = 4 * c * itemsize + 3 * c * 4        # 2x(in)+2x(out) + f32 temps
    ts_io = (4 << 20) // max(c * itemsize, 1)          # ~4 MiB input block
    ts_budget = (36 << 20) // max(per_col_vmem, 1)     # VMEM budget cap
    ts = _round_up(max(128, min(ts_io, ts_budget, s)), 128)

    # v7x megacore: ensure >=2 parallel grid steps when b == 1 so both
    # TensorCores get work (harmless on single-TC v5e/v6e).
    if b == 1 and pl.cdiv(s, ts) < 2 and ts > 128:
        ts = _round_up(max(128, _round_up(s, 128) // 2), 128)

    n_s = pl.cdiv(s, ts)                # ragged tail handled by masked edge blocks

    vmem_need = per_col_vmem * ts
    vmem_limit = int(min(48 << 20, max(32 << 20, vmem_need + (8 << 20))))

    kernel = _make_layernorm_kernel(eps)

    out2 = pl.pallas_call(
        kernel,
        out_shape=jax.ShapeDtypeStruct((b, c, s), x.dtype),
        grid_spec=pltpu.PrefetchScalarGridSpec(
            num_scalar_prefetch=0,
            grid=(b, n_s),
            in_specs=[
                pl.BlockSpec((None, c, ts), lambda i, j: (i, 0, j)),
                pl.BlockSpec((c, 1), lambda i, j: (0, 0)),
            ],
            out_specs=pl.BlockSpec((None, c, ts), lambda i, j: (i, 0, j)),
        ),
        compiler_params=pltpu.CompilerParams(
            dimension_semantics=("parallel", "parallel"),
            vmem_limit_bytes=vmem_limit),
    )(x2, g2)

    return out2.reshape(b, c, f, h, w)


def _reference(x, gamma, eps=1e-5):
    """Pure-JAX reference matching the PyTorch module."""
    mean = jnp.mean(x, axis=1, keepdims=True)
    var = jnp.mean((x - mean) ** 2, axis=1, keepdims=True)   # unbiased=False
    return (x - mean) / jnp.sqrt(var + eps) * gamma.reshape(1, -1, 1, 1, 1)


if __name__ == "__main__":
    key = jax.random.PRNGKey(0)
    kx, kg, kx2, kg2 = jax.random.split(key, 4)

    # Test 1: small 'b c f h w' video shape, spatial extent a multiple of 128.
    B, C, F, H, W = 2, 32, 8, 16, 16
    x = jax.random.normal(kx, (B, C, F, H, W), dtype=jnp.float32)
    gamma = 1.0 + 0.1 * jax.random.normal(kg, (C,), dtype=jnp.float32)
    out = jax.block_until_ready(layernorm(x, gamma, eps=1e-5))
    ref = _reference(x, gamma, eps=1e-5)
    assert out.shape == x.shape
    assert jnp.allclose(out, ref, atol=1e-4, rtol=1e-4), float(
        jnp.max(jnp.abs(out - ref)))

    # Test 2: ragged spatial extent (s = 300) with b == 1 -- exercises the
    # masked tail block and the >=2-grid-step (megacore) split.
    B2, C2, F2, H2, W2 = 1, 16, 3, 10, 10
    x_r = jax.random.normal(kx2, (B2, C2, F2, H2, W2), dtype=jnp.float32)
    gamma_r = 1.0 + 0.1 * jax.random.normal(kg2, (C2,), dtype=jnp.float32)
    out_r = jax.block_until_ready(layernorm(x_r, gamma_r, eps=1e-5))
    ref_r = _reference(x_r, gamma_r, eps=1e-5)
    assert out_r.shape == x_r.shape
    assert jnp.allclose(out_r, ref_r, atol=1e-4, rtol=1e-4), float(
        jnp.max(jnp.abs(out_r - ref_r)))

    print("KERNEL_OK")
</pallas_src>

<mosaic_0001>
module attributes {stable_mosaic.version = 11 : i64} {
  func.func @layernorm_kernel(%arg0: i32, %arg1: i32, %arg2: memref<1x32x2048xf32, #tpu.memory_space<vmem>>, %arg3: memref<32x1xf32, #tpu.memory_space<vmem>>, %arg4: memref<1x32x2048xf32, #tpu.memory_space<vmem>>) attributes {dimension_semantics = [#tpu.dimension_semantics<parallel>, #tpu.dimension_semantics<parallel>], iteration_bounds = array<i64: 2, 1>, scalar_prefetch = 0 : i64, scratch_operands = 0 : i64, tpu.core_type = #tpu.core_type<tc>, window_params = [{transform_indices = @transform_0, window_bounds = array<i64: 1, 32, 2048>}, {pipeline_mode = #tpu.pipeline_mode<synchronous>, transform_indices = @transform_1, window_bounds = array<i64: 32, 1>}, {transform_indices = @transform_2, window_bounds = array<i64: 1, 32, 2048>}]} {
    %c0 = arith.constant 0 : index
    %c0_0 = arith.constant 0 : index
    %c0_1 = arith.constant 0 : index
    %0 = vector.load %arg2[%c0, %c0_0, %c0_1] : memref<1x32x2048xf32, #tpu.memory_space<vmem>>, vector<1x32x2048xf32>
    %1 = vector.shape_cast %0 : vector<1x32x2048xf32> to vector<32x2048xf32>
    %cst = arith.constant dense<0.000000e+00> : vector<2048xf32>
    %2 = vector.multi_reduction <add>, %1, %cst [0] : vector<32x2048xf32> to vector<2048xf32>
    %3 = vector.shape_cast %2 : vector<2048xf32> to vector<1x2048xf32>
    %cst_2 = arith.constant 3.200000e+01 : f32
    %4 = vector.broadcast %cst_2 : f32 to vector<1x2048xf32>
    %5 = arith.divf %3, %4 : vector<1x2048xf32>
    %6 = vector.broadcast %5 : vector<1x2048xf32> to vector<32x2048xf32>
    %7 = arith.subf %1, %6 : vector<32x2048xf32>
    %8 = arith.mulf %7, %7 : vector<32x2048xf32>
    %cst_3 = arith.constant dense<0.000000e+00> : vector<2048xf32>
    %9 = vector.multi_reduction <add>, %8, %cst_3 [0] : vector<32x2048xf32> to vector<2048xf32>
    %10 = vector.shape_cast %9 : vector<2048xf32> to vector<1x2048xf32>
    %cst_4 = arith.constant 3.200000e+01 : f32
    %11 = vector.broadcast %cst_4 : f32 to vector<1x2048xf32>
    %12 = arith.divf %10, %11 : vector<1x2048xf32>
    %cst_5 = arith.constant 9.99999974E-6 : f32
    %13 = vector.broadcast %cst_5 : f32 to vector<1x2048xf32>
    %14 = arith.addf %12, %13 : vector<1x2048xf32>
    %15 = math.rsqrt %14 : vector<1x2048xf32>
    %c0_6 = arith.constant 0 : index
    %c0_7 = arith.constant 0 : index
    %16 = vector.load %arg3[%c0_6, %c0_7] : memref<32x1xf32, #tpu.memory_space<vmem>>, vector<32x1xf32>
    %17 = vector.broadcast %15 : vector<1x2048xf32> to vector<32x2048xf32>
    %18 = arith.mulf %7, %17 : vector<32x2048xf32>
    %19 = vector.broadcast %16 : vector<32x1xf32> to vector<32x2048xf32>
    %20 = arith.mulf %18, %19 : vector<32x2048xf32>
    %c0_8 = arith.constant 0 : index
    %c0_9 = arith.constant 0 : index
    %c0_10 = arith.constant 0 : index
    %21 = vector.load %arg4[%c0_8, %c0_9, %c0_10] : memref<1x32x2048xf32, #tpu.memory_space<vmem>>, vector<1x32x2048xf32>
    %22 = vector.shape_cast %21 : vector<1x32x2048xf32> to vector<32x2048xf32>
    %23 = vector.shape_cast %20 : vector<32x2048xf32> to vector<1x32x2048xf32>
    tpu.vector_store %arg4[%c0_8, %c0_9, %c0_10], %23 {strides = array<i32>} : memref<1x32x2048xf32, #tpu.memory_space<vmem>>, vector<1x32x2048xf32>,
    return
  }
  func.func @transform_0(%arg0: i32, %arg1: i32) -> (i32, i32, i32) {
    %c0_i32 = arith.constant 0 : i32
    %c0_i32_0 = arith.constant 0 : i32
    return %arg0, %c0_i32, %arg1 : i32, i32, i32
  }
  func.func @transform_1(%arg0: i32, %arg1: i32) -> (i32, i32) {
    %c0_i32 = arith.constant 0 : i32
    %c0_i32_0 = arith.constant 0 : i32
    %c0_i32_1 = arith.constant 0 : i32
    return %c0_i32, %c0_i32_0 : i32, i32
  }
  func.func @transform_2(%arg0: i32, %arg1: i32) -> (i32, i32, i32) {
    %c0_i32 = arith.constant 0 : i32
    %c0_i32_0 = arith.constant 0 : i32
    return %arg0, %c0_i32, %arg1 : i32, i32, i32
  }
}

</mosaic_0001>

<llo_original>
// kernel: layernorm.1
$region0: #{layernorm.1}
  #allocation0 [shape = 'u32[]', space=smem, size = 0x4, offset = 0x4, fixed_abs, tag = 'smem constant byte address 0x4 - core index']
  #allocation1 [shape = 'u32[144,128]{1,0:T(1,128)}', space=vmem, size = 0x12000, scoped, tag = 'internal scratch']
  %s0 = inlined_call_operand.vmem [shape: f32[2,32,2048], index: 0, kind: input, shape index: {}]
  %s1 = inlined_call_operand.vmem [shape: f32[32,1], index: 1, kind: input, shape index: {}]
  %s2 = inlined_call_operand.vmem [shape: f32[2,32,2048], index: 2, kind: output, shape index: {}]
  %s3 = sld [smem:[#allocation0]]
  $region41: #{layernorm.1} parent=0
    _
  %s5 = ssub.s32 1, %s3
  %s6 = scalar_select 0, %s5, %s3
  loop: start=0, step=1, limit=4
  $region2: #{layernorm.1} parent=0 // loop_pre_header
    _
  $region3: #{layernorm.1} parent=0 // loop_header
    %s8 = sphi 0, %s12
    %p9 = scmp.ge.s32.totalorder %s8, 4
    %s15 = sphi 0, %s27
    %s16 = sphi 0, %s23
    %s17 = sphi 0, %s15
    %s18 = sphi 0, %s16
    %s19 = sphi 0, %s17
    %s20 = sphi 0, %s18
    %s32 = sphi 0, %s34
    %s35 = sphi 0, %s32
    %s36 = sphi 0, %s35
    %s52 = sphi 0, %s36
    %s56 = sphi 0, %s56
    %s58 = sphi 0, %s56
    %s59 = sphi 0, %s58
    %s73 = sphi 0, %s59
    %s81 = sphi 0, %s83
    %s84 = sphi 0, %s81
    %s85 = sphi 0, %s84
    %s101 = sphi 0, %s85
  $region4: #{layernorm.1} parent=0 // loop_header_branch
    %11 = sbr.rel (%p9) target = $region8
  $region5: #{layernorm.1} parent=0 // loop_body
    %s13 = ssub.s32 %s8, 1
    %s14 = ssub.s32 %s8, 2
    %s21 = sadd.s32 1, %s16
    %p22 = scmp.ge.s32.totalorder %s21, 1
    %s23 = scalar_select %p22, 0, %s21
    %s24 = sadd.s32 1, %s15
    %s25 = scalar_select %p22, %s24, %s15
    %p26 = scmp.ge.s32.totalorder %s25, 2
    %s27 = scalar_select %p26, 0, %s25
    %s28 = ssub.s32 %s15, %s27
    %s29 = ssub.s32 %s16, %s23
    %s30 = sor.u32 %s28, %s29
    %p31 = scmp.eq.s32.totalorder %s30, 0
    %s33 = sadd.s32 %s32, 1
    %s34 = scalar_select %p31, %s32, %s33
    %p37 = pneg %p31
    %p38 = scmp.eq.s32.totalorder %s8, 1
    %p39 = por %p37, %p38
    %p40 = scmp.ne.s32.totalorder %s32, %s35
    %p41 = scmp.eq.s32.totalorder %s8, 0
    %p42 = por %p40, %p41
    %p43 = scmp.ne.s32.totalorder %s32, %s35
    %p44 = scmp.eq.s32.totalorder %s13, 1
    %p45 = por %p43, %p44
    %p46 = scmp.ne.s32.totalorder %s35, %s36
    %p47 = scmp.eq.s32.totalorder %s13, 0
    %p48 = por %p46, %p47
    %p49 = scmp.ne.s32.totalorder %s35, %s36
    %p50 = scmp.eq.s32.totalorder %s14, 1
    %p51 = por %p49, %p50
    %p53 = scmp.ne.s32.totalorder %s36, %s52
    %p54 = scmp.eq.s32.totalorder %s14, 0
    %p55 = por %p53, %p54
    %s57 = sadd.s32 %s56, 1
    %p60 = scmp.eq.s32.totalorder %s8, 1
    %p61 = scmp.ne.s32.totalorder %s56, %s58
    %p62 = scmp.eq.s32.totalorder %s8, 0
    %p63 = por %p61, %p62
    %p64 = scmp.ne.s32.totalorder %s56, %s58
    %p65 = scmp.eq.s32.totalorder %s13, 1
    %p66 = por %p64, %p65
    %p67 = scmp.ne.s32.totalorder %s58, %s59
    %p68 = scmp.eq.s32.totalorder %s13, 0
    %p69 = por %p67, %p68
    %p70 = scmp.ne.s32.totalorder %s58, %s59
    %p71 = scmp.eq.s32.totalorder %s14, 1
    %p72 = por %p70, %p71
    %p74 = scmp.ne.s32.totalorder %s59, %s73
    %p75 = scmp.eq.s32.totalorder %s14, 0
    %p76 = por %p74, %p75
    %s77 = ssub.s32 %s15, %s27
    %s78 = ssub.s32 %s16, %s23
    %s79 = sor.u32 %s77, %s78
    %p80 = scmp.eq.s32.totalorder %s79, 0
    %s82 = sadd.s32 %s81, 1
    %s83 = scalar_select %p80, %s81, %s82
    %p86 = pneg %p80
    %p87 = scmp.eq.s32.totalorder %s8, 1
    %p88 = por %p86, %p87
    %p89 = scmp.ne.s32.totalorder %s81, %s84
    %p90 = scmp.eq.s32.totalorder %s8, 0
    %p91 = por %p89, %p90
    %p92 = scmp.ne.s32.totalorder %s81, %s84
    %p93 = scmp.eq.s32.totalorder %s13, 1
    %p94 = por %p92, %p93
    %p95 = scmp.ne.s32.totalorder %s84, %s85
    %p96 = scmp.eq.s32.totalorder %s13, 0
    %p97 = por %p95, %p96
    %p98 = scmp.ne.s32.totalorder %s84, %s85
    %p99 = scmp.eq.s32.totalorder %s14, 1
    %p100 = por %p98, %p99
    %p102 = scmp.ne.s32.totalorder %s85, %s101
    %p103 = scmp.eq.s32.totalorder %s14, 0
    %p104 = por %p102, %p103
    %p105 = scmp.le.s32.totalorder 1, %s8
    %p106 = scmp.lt.s32.totalorder %s8, 3
    %p107 = pnand %p105, %p106
    %p108 = pneg %p107
    // Predicated region
    $region9: #{layernorm.1} parent=5 // pred_check
      _
    $region10: #{layernorm.1} parent=5 // pred_check_branch
      %110 = sbr.rel (%p107) target = $region12
    $region11: #{layernorm.1} parent=5 // pred_region
      %s111 = ssub.s32 %s8, 1
      // Predicated region
      $region13: #{layernorm.1} parent=11 // pred_check
        %p112 = pneg %p69
      $region14: #{layernorm.1} parent=11 // pred_check_branch
        %114 = sbr.rel (%p112) target = $region16
      $region15: #{layernorm.1} parent=11 // pred_region
        _
      $region16: #{layernorm.1} parent=11 // pred_fallthru
        _
    $region12: #{layernorm.1} parent=5 // pred_fallthru
      _
    %p115 = scmp.lt.s32.totalorder %s8, 2
    // Predicated region
    $region17: #{layernorm.1} parent=5 // pred_check
      %p116 = pneg %p115
    $region18: #{layernorm.1} parent=5 // pred_check_branch
      %118 = sbr.rel (%p116) target = $region20
    $region19: #{layernorm.1} parent=5 // pred_region
      // Predicated region
      $region21: #{layernorm.1} parent=19 // pred_check
        %p119 = pneg %p42
      $region22: #{layernorm.1} parent=19 // pred_check_branch
        %121 = sbr.rel (%p119) target = $region24
      $region23: #{layernorm.1} parent=19 // pred_region
        %s122 = smul.u32 16, %s16
        %p123 = scmp.lt.s32.totalorder %s15, 1
        %s124 = scalar_select %p123, %s15, 1
        %p125 = scmp.lt.s32.totalorder %s122, 15
        %s126 = scalar_select %p125, %s122, 15
        %s127 = smul.addr %s124, 64
        %s128 = sadd.s32 %s126, %s127
        %s129 = smul.addr %s128, 8
        %s130 = scalar_lea.vmem %s0, %s129
        %s131 = smul.u32 16, %s16
      $region24: #{layernorm.1} parent=19 // pred_fallthru
        _
    $region20: #{layernorm.1} parent=5 // pred_fallthru
      _
    %p132 = scmp.le.s32.totalorder 1, %s8
    %p133 = scmp.lt.s32.totalorder %s8, 3
    %p134 = pnand %p132, %p133
    %p135 = pneg %p134
    // Predicated region
    $region25: #{layernorm.1} parent=5 // pred_check
      _
    $region26: #{layernorm.1} parent=5 // pred_check_branch
      %137 = sbr.rel (%p134) target = $region28
    $region27: #{layernorm.1} parent=5 // pred_region
      %s138 = ssub.s32 %s8, 1
      %s139 = smul.u32 16, %s18
      %p140 = scmp.lt.s32.totalorder %s17, 1
      %s141 = scalar_select %p140, %s17, 1
      %p142 = scmp.lt.s32.totalorder %s139, 15
      %s143 = scalar_select %p142, %s139, 15
      %s144 = smul.addr %s141, 64
      %s145 = sadd.s32 %s143, %s144
      %s146 = smul.addr %s145, 8
      %s147 = scalar_lea.vmem %s0, %s146
      %p148 = pneg %p48
      %p149 = pneg %p45
      %p150 = pneg %p69
      %p151 = pneg %p66
      %p152 = pneg %p97
      %p153 = pneg %p94
      %s154 = smul.u32 16, %s18
      %p155 = scmp.lt.s32.totalorder %s17, 1
      %s156 = scalar_select %p155, %s17, 1
      %p157 = scmp.lt.s32.totalorder %s154, 15
      %s158 = scalar_select %p157, %s154, 15
      %s159 = smul.addr %s156, 64
      %s160 = sadd.s32 %s158, %s159
      %s161 = smul.addr %s160, 8
      %s162 = scalar_lea.vmem %s2, %s161
      %s163 = smul.u32 16, %s18
      %p164 = scmp.lt.s32.totalorder %s17, 1
      %s165 = scalar_select %p164, %s17, 1
      %p166 = scmp.lt.s32.totalorder %s163, 15
      %s167 = scalar_select %p166, %s163, 15
      %s168 = smul.addr %s165, 64
      %s169 = sadd.s32 %s167, %s168
      %s170 = smul.addr %s169, 8
      %s171 = scalar_lea.vmem %s0, %s170
      %s172 = smul.u32 16, %s18
      %s173 = smul.u32 16, %s18
      %p174 = scmp.lt.s32.totalorder %s17, 1
      %s175 = scalar_select %p174, %s17, 1
      %p176 = scmp.lt.s32.totalorder %s173, 15
      %s177 = scalar_select %p176, %s173, 15
      %s178 = smul.addr %s175, 64
      %s179 = sadd.s32 %s177, %s178
      %s180 = smul.addr %s179, 8
      %s181 = scalar_lea.vmem %s2, %s180
      %s182 = smul.u32 16, %s18
      %v183 = vld [vmem:[%s171] sm:$0xff]
      %v184 = vld [vmem:[%s171 + $0x8] sm:$0xff]
      %v185 = vld [vmem:[%s171 + $0x10] sm:$0xff]
      %v186 = vld [vmem:[%s171 + $0x18] sm:$0xff]
      %v187 = vld [vmem:[%s171 + $0x20] sm:$0xff]
      %v188 = vld [vmem:[%s171 + $0x28] sm:$0xff]
      %v189 = vld [vmem:[%s171 + $0x30] sm:$0xff]
      %v190 = vld [vmem:[%s171 + $0x38] sm:$0xff]
      %v191 = vld [vmem:[%s171 + $0x40] sm:$0xff]
      %v192 = vld [vmem:[%s171 + $0x48] sm:$0xff]
      %v193 = vld [vmem:[%s171 + $0x50] sm:$0xff]
      %v194 = vld [vmem:[%s171 + $0x58] sm:$0xff]
      %v195 = vld [vmem:[%s171 + $0x60] sm:$0xff]
      %v196 = vld [vmem:[%s171 + $0x68] sm:$0xff]
      %v197 = vld [vmem:[%s171 + $0x70] sm:$0xff]
      %v198 = vld [vmem:[%s171 + $0x78] sm:$0xff]
      %v199 = vld [vmem:[%s171 + $0x80] sm:$0xff]
      %v200 = vld [vmem:[%s171 + $0x88] sm:$0xff]
      %v201 = vld [vmem:[%s171 + $0x90] sm:$0xff]
      %v202 = vld [vmem:[%s171 + $0x98] sm:$0xff]
      %v203 = vld [vmem:[%s171 + $0xa0] sm:$0xff]
      %v204 = vld [vmem:[%s171 + $0xa8] sm:$0xff]
      %v205 = vld [vmem:[%s171 + $0xb0] sm:$0xff]
      %v206 = vld [vmem:[%s171 + $0xb8] sm:$0xff]
      %v207 = vld [vmem:[%s171 + $0xc0] sm:$0xff]
      %v208 = vld [vmem:[%s171 + $0xc8] sm:$0xff]
      %v209 = vld [vmem:[%s171 + $0xd0] sm:$0xff]
      %v210 = vld [vmem:[%s171 + $0xd8] sm:$0xff]
      %v211 = vld [vmem:[%s171 + $0xe0] sm:$0xff]
      %v212 = vld [vmem:[%s171 + $0xe8] sm:$0xff]
      %v213 = vld [vmem:[%s171 + $0xf0] sm:$0xff]
      %v214 = vld [vmem:[%s171 + $0xf8] sm:$0xff]
      %v215 = vld [vmem:[%s171 + $0x100] sm:$0xff]
      %v216 = vld [vmem:[%s171 + $0x108] sm:$0xff]
      %v217 = vld [vmem:[%s171 + $0x110] sm:$0xff]
      %v218 = vld [vmem:[%s171 + $0x118] sm:$0xff]
      %v219 = vld [vmem:[%s171 + $0x120] sm:$0xff]
      %v220 = vld [vmem:[%s171 + $0x128] sm:$0xff]
      %v221 = vld [vmem:[%s171 + $0x130] sm:$0xff]
      %v222 = vld [vmem:[%s171 + $0x138] sm:$0xff]
      %v223 = vld [vmem:[%s171 + $0x140] sm:$0xff]
      %v224 = vld [vmem:[%s171 + $0x148] sm:$0xff]
      %v225 = vld [vmem:[%s171 + $0x150] sm:$0xff]
      %v226 = vld [vmem:[%s171 + $0x158] sm:$0xff]
      %v227 = vld [vmem:[%s171 + $0x160] sm:$0xff]
      %v228 = vld [vmem:[%s171 + $0x168] sm:$0xff]
      %v229 = vld [vmem:[%s171 + $0x170] sm:$0xff]
      %v230 = vld [vmem:[%s171 + $0x178] sm:$0xff]
      %v231 = vld [vmem:[%s171 + $0x180] sm:$0xff]
      %v232 = vld [vmem:[%s171 + $0x188] sm:$0xff]
      %v233 = vld [vmem:[%s171 + $0x190] sm:$0xff]
      %v234 = vld [vmem:[%s171 + $0x198] sm:$0xff]
      %v235 = vld [vmem:[%s171 + $0x1a0] sm:$0xff]
      %v236 = vld [vmem:[%s171 + $0x1a8] sm:$0xff]
      %v237 = vld [vmem:[%s171 + $0x1b0] sm:$0xff]
      %v238 = vld [vmem:[%s171 + $0x1b8] sm:$0xff]
      %v239 = vld [vmem:[%s171 + $0x1c0] sm:$0xff]
      %v240 = vld [vmem:[%s171 + $0x1c8] sm:$0xff]
      %v241 = vld [vmem:[%s171 + $0x1d0] sm:$0xff]
      %v242 = vld [vmem:[%s171 + $0x1d8] sm:$0xff]
      %v243 = vld [vmem:[%s171 + $0x1e0] sm:$0xff]
      %v244 = vld [vmem:[%s171 + $0x1e8] sm:$0xff]
      %v245 = vld [vmem:[%s171 + $0x1f0] sm:$0xff]
      %v246 = vld [vmem:[%s171 + $0x1f8] sm:$0xff]
      %v247 = vadd.f32 %v183, %v199
      %v248 = vadd.f32 %v247, %v215
      %v249 = vadd.f32 %v248, %v231
      %v250 = vrot.slane %v249, 4
      %v251 = vadd.f32 %v249, %v250
      %v252 = vrot.slane %v251, 2
      %v253 = vadd.f32 %v251, %v252
      %v254 = vrot.slane %v253, 1
      %v255 = vadd.f32 %v253, %v254
      %v256 = vadd.f32 %v184, %v200
      %v257 = vadd.f32 %v256, %v216
      %v258 = vadd.f32 %v257, %v232
      %v259 = vrot.slane %v258, 4
      %v260 = vadd.f32 %v258, %v259
      %v261 = vrot.slane %v260, 2
      %v262 = vadd.f32 %v260, %v261
      %v263 = vrot.slane %v262, 1
      %v264 = vadd.f32 %v262, %v263
      %v265 = vadd.f32 %v185, %v201
      %v266 = vadd.f32 %v265, %v217
      %v267 = vadd.f32 %v266, %v233
      %v268 = vrot.slane %v267, 4
      %v269 = vadd.f32 %v267, %v268
      %v270 = vrot.slane %v269, 2
      %v271 = vadd.f32 %v269, %v270
      %v272 = vrot.slane %v271, 1
      %v273 = vadd.f32 %v271, %v272
      %v274 = vadd.f32 %v186, %v202
      %v275 = vadd.f32 %v274, %v218
      %v276 = vadd.f32 %v275, %v234
      %v277 = vrot.slane %v276, 4
      %v278 = vadd.f32 %v276, %v277
      %v279 = vrot.slane %v278, 2
      %v280 = vadd.f32 %v278, %v279
      %v281 = vrot.slane %v280, 1
      %v282 = vadd.f32 %v280, %v281
      %v283 = vadd.f32 %v187, %v203
      %v284 = vadd.f32 %v283, %v219
      %v285 = vadd.f32 %v284, %v235
      %v286 = vrot.slane %v285, 4
      %v287 = vadd.f32 %v285, %v286
      %v288 = vrot.slane %v287, 2
      %v289 = vadd.f32 %v287, %v288
      %v290 = vrot.slane %v289, 1
      %v291 = vadd.f32 %v289, %v290
      %v292 = vadd.f32 %v188, %v204
      %v293 = vadd.f32 %v292, %v220
      %v294 = vadd.f32 %v293, %v236
      %v295 = vrot.slane %v294, 4
      %v296 = vadd.f32 %v294, %v295
      %v297 = vrot.slane %v296, 2
      %v298 = vadd.f32 %v296, %v297
      %v299 = vrot.slane %v298, 1
      %v300 = vadd.f32 %v298, %v299
      %v301 = vadd.f32 %v189, %v205
      %v302 = vadd.f32 %v301, %v221
      %v303 = vadd.f32 %v302, %v237
      %v304 = vrot.slane %v303, 4
      %v305 = vadd.f32 %v303, %v304
      %v306 = vrot.slane %v305, 2
      %v307 = vadd.f32 %v305, %v306
      %v308 = vrot.slane %v307, 1
      %v309 = vadd.f32 %v307, %v308
      %v310 = vadd.f32 %v190, %v206
      %v311 = vadd.f32 %v310, %v222
      %v312 = vadd.f32 %v311, %v238
      %v313 = vrot.slane %v312, 4
      %v314 = vadd.f32 %v312, %v313
      %v315 = vrot.slane %v314, 2
      %v316 = vadd.f32 %v314, %v315
      %v317 = vrot.slane %v316, 1
      %v318 = vadd.f32 %v316, %v317
      %v319 = vadd.f32 %v191, %v207
      %v320 = vadd.f32 %v319, %v223
      %v321 = vadd.f32 %v320, %v239
      %v322 = vrot.slane %v321, 4
      %v323 = vadd.f32 %v321, %v322
      %v324 = vrot.slane %v323, 2
      %v325 = vadd.f32 %v323, %v324
      %v326 = vrot.slane %v325, 1
      %v327 = vadd.f32 %v325, %v326
      %v328 = vadd.f32 %v192, %v208
      %v329 = vadd.f32 %v328, %v224
      %v330 = vadd.f32 %v329, %v240
      %v331 = vrot.slane %v330, 4
      %v332 = vadd.f32 %v330, %v331
      %v333 = vrot.slane %v332, 2
      %v334 = vadd.f32 %v332, %v333
      %v335 = vrot.slane %v334, 1
      %v336 = vadd.f32 %v334, %v335
      %v337 = vadd.f32 %v193, %v209
      %v338 = vadd.f32 %v337, %v225
      %v339 = vadd.f32 %v338, %v241
      %v340 = vrot.slane %v339, 4
      %v341 = vadd.f32 %v339, %v340
      %v342 = vrot.slane %v341, 2
      %v343 = vadd.f32 %v341, %v342
      %v344 = vrot.slane %v343, 1
      %v345 = vadd.f32 %v343, %v344
      %v346 = vadd.f32 %v194, %v210
      %v347 = vadd.f32 %v346, %v226
      %v348 = vadd.f32 %v347, %v242
      %v349 = vrot.slane %v348, 4
      %v350 = vadd.f32 %v348, %v349
      %v351 = vrot.slane %v350, 2
      %v352 = vadd.f32 %v350, %v351
      %v353 = vrot.slane %v352, 1
      %v354 = vadd.f32 %v352, %v353
      %v355 = vadd.f32 %v195, %v211
      %v356 = vadd.f32 %v355, %v227
      %v357 = vadd.f32 %v356, %v243
      %v358 = vrot.slane %v357, 4
      %v359 = vadd.f32 %v357, %v358
      %v360 = vrot.slane %v359, 2
      %v361 = vadd.f32 %v359, %v360
      %v362 = vrot.slane %v361, 1
      %v363 = vadd.f32 %v361, %v362
      %v364 = vadd.f32 %v196, %v212
      %v365 = vadd.f32 %v364, %v228
      %v366 = vadd.f32 %v365, %v244
      %v367 = vrot.slane %v366, 4
      %v368 = vadd.f32 %v366, %v367
      %v369 = vrot.slane %v368, 2
      %v370 = vadd.f32 %v368, %v369
      %v371 = vrot.slane %v370, 1
      %v372 = vadd.f32 %v370, %v371
      %v373 = vadd.f32 %v197, %v213
      %v374 = vadd.f32 %v373, %v229
      %v375 = vadd.f32 %v374, %v245
      %v376 = vrot.slane %v375, 4
      %v377 = vadd.f32 %v375, %v376
      %v378 = vrot.slane %v377, 2
      %v379 = vadd.f32 %v377, %v378
      %v380 = vrot.slane %v379, 1
      %v381 = vadd.f32 %v379, %v380
      %v382 = vadd.f32 %v198, %v214
      %v383 = vadd.f32 %v382, %v230
      %v384 = vadd.f32 %v383, %v246
      %v385 = vrot.slane %v384, 4
      %v386 = vadd.f32 %v384, %v385
      %v387 = vrot.slane %v386, 2
      %v388 = vadd.f32 %v386, %v387
      %v389 = vrot.slane %v388, 1
      %v390 = vadd.f32 %v388, %v389
      %v391 = vrcp.pop 32.0
      %v392 = vmul.f32 %v255, %v391
      %v393 = vmul.f32 %v264, %v391
      %v394 = vmul.f32 %v273, %v391
      %v395 = vmul.f32 %v282, %v391
      %v396 = vmul.f32 %v291, %v391
      %v397 = vmul.f32 %v300, %v391
      %v398 = vmul.f32 %v309, %v391
      %v399 = vmul.f32 %v318, %v391
      %v400 = vmul.f32 %v327, %v391
      %v401 = vmul.f32 %v336, %v391
      %v402 = vmul.f32 %v345, %v391
      %v403 = vmul.f32 %v354, %v391
      %v404 = vmul.f32 %v363, %v391
      %v405 = vmul.f32 %v372, %v391
      %v406 = vmul.f32 %v381, %v391
      %v407 = vmul.f32 %v390, %v391
      %v408 = vsub.f32 %v183, %v392
      %v409 = vsub.f32 %v184, %v393
      %v410 = vsub.f32 %v185, %v394
      %v411 = vsub.f32 %v186, %v395
      %v412 = vsub.f32 %v187, %v396
      %v413 = vsub.f32 %v188, %v397
      %v414 = vsub.f32 %v189, %v398
      %v415 = vsub.f32 %v190, %v399
      %v416 = vsub.f32 %v191, %v400
      %v417 = vsub.f32 %v192, %v401
      %v418 = vsub.f32 %v193, %v402
      %v419 = vsub.f32 %v194, %v403
      %v420 = vsub.f32 %v195, %v404
      %v421 = vsub.f32 %v196, %v405
      %v422 = vsub.f32 %v197, %v406
      %v423 = vsub.f32 %v198, %v407
      %v424 = vsub.f32 %v199, %v392
      %v425 = vsub.f32 %v200, %v393
      %v426 = vsub.f32 %v201, %v394
      %v427 = vsub.f32 %v202, %v395
      %v428 = vsub.f32 %v203, %v396
      %v429 = vsub.f32 %v204, %v397
      %v430 = vsub.f32 %v205, %v398
      %v431 = vsub.f32 %v206, %v399
      %v432 = vsub.f32 %v207, %v400
      %v433 = vsub.f32 %v208, %v401
      %v434 = vsub.f32 %v209, %v402
      %v435 = vsub.f32 %v210, %v403
      %v436 = vsub.f32 %v211, %v404
      %v437 = vsub.f32 %v212, %v405
      %v438 = vsub.f32 %v213, %v406
      %v439 = vsub.f32 %v214, %v407
      %v440 = vsub.f32 %v215, %v392
      %v441 = vsub.f32 %v216, %v393
      %v442 = vsub.f32 %v217, %v394
      %v443 = vsub.f32 %v218, %v395
      %v444 = vsub.f32 %v219, %v396
      %v445 = vsub.f32 %v220, %v397
      %v446 = vsub.f32 %v221, %v398
      %v447 = vsub.f32 %v222, %v399
      %v448 = vsub.f32 %v223, %v400
      %v449 = vsub.f32 %v224, %v401
      %v450 = vsub.f32 %v225, %v402
      %v451 = vsub.f32 %v226, %v403
      %v452 = vsub.f32 %v227, %v404
      %v453 = vsub.f32 %v228, %v405
      %v454 = vsub.f32 %v229, %v406
      %v455 = vsub.f32 %v230, %v407
      %v456 = vsub.f32 %v231, %v392
      %v457 = vsub.f32 %v232, %v393
      %v458 = vsub.f32 %v233, %v394
      %v459 = vsub.f32 %v234, %v395
      %v460 = vsub.f32 %v235, %v396
      %v461 = vsub.f32 %v236, %v397
      %v462 = vsub.f32 %v237, %v398
      %v463 = vsub.f32 %v238, %v399
      %v464 = vsub.f32 %v239, %v400
      %v465 = vsub.f32 %v240, %v401
      %v466 = vsub.f32 %v241, %v402
      %v467 = vsub.f32 %v242, %v403
      %v468 = vsub.f32 %v243, %v404
      %v469 = vsub.f32 %v244, %v405
      %v470 = vsub.f32 %v245, %v406
      %v471 = vsub.f32 %v246, %v407
      %v472 = vmul.f32 %v408, %v408
      %v473 = vmul.f32 %v409, %v409
      %v474 = vmul.f32 %v410, %v410
      %v475 = vmul.f32 %v411, %v411
      %v476 = vmul.f32 %v412, %v412
      %v477 = vmul.f32 %v413, %v413
      %v478 = vmul.f32 %v414, %v414
      %v479 = vmul.f32 %v415, %v415
      %v480 = vmul.f32 %v416, %v416
      %v481 = vmul.f32 %v417, %v417
      %v482 = vmul.f32 %v418, %v418
      %v483 = vmul.f32 %v419, %v419
      %v484 = vmul.f32 %v420, %v420
      %v485 = vmul.f32 %v421, %v421
      %v486 = vmul.f32 %v422, %v422
      %v487 = vmul.f32 %v423, %v423
      %v488 = vmul.f32 %v424, %v424
      %v489 = vmul.f32 %v425, %v425
      %v490 = vmul.f32 %v426, %v426
      %v491 = vmul.f32 %v427, %v427
      %v492 = vmul.f32 %v428, %v428
      %v493 = vmul.f32 %v429, %v429
      %v494 = vmul.f32 %v430, %v430
      %v495 = vmul.f32 %v431, %v431
      %v496 = vmul.f32 %v432, %v432
      %v497 = vmul.f32 %v433, %v433
      %v498 = vmul.f32 %v434, %v434
      %v499 = vmul.f32 %v435, %v435
      %v500 = vmul.f32 %v436, %v436
      %v501 = vmul.f32 %v437, %v437
      %v502 = vmul.f32 %v438, %v438
      %v503 = vmul.f32 %v439, %v439
      %v504 = vmul.f32 %v440, %v440
      %v505 = vmul.f32 %v441, %v441
      %v506 = vmul.f32 %v442, %v442
      %v507 = vmul.f32 %v443, %v443
      %v508 = vmul.f32 %v444, %v444
      %v509 = vmul.f32 %v445, %v445
      %v510 = vmul.f32 %v446, %v446
      %v511 = vmul.f32 %v447, %v447
      %v512 = vmul.f32 %v448, %v448
      %v513 = vmul.f32 %v449, %v449
      %v514 = vmul.f32 %v450, %v450
      %v515 = vmul.f32 %v451, %v451
      %v516 = vmul.f32 %v452, %v452
      %v517 = vmul.f32 %v453, %v453
      %v518 = vmul.f32 %v454, %v454
      %v519 = vmul.f32 %v455, %v455
      %v520 = vmul.f32 %v456, %v456
      %v521 = vmul.f32 %v457, %v457
      %v522 = vmul.f32 %v458, %v458
      %v523 = vmul.f32 %v459, %v459
      %v524 = vmul.f32 %v460, %v460
      %v525 = vmul.f32 %v461, %v461
      %v526 = vmul.f32 %v462, %v462
      %v527 = vmul.f32 %v463, %v463
      %v528 = vmul.f32 %v464, %v464
      %v529 = vmul.f32 %v465, %v465
      %v530 = vmul.f32 %v466, %v466
      %v531 = vmul.f32 %v467, %v467
      %v532 = vmul.f32 %v468, %v468
      %v533 = vmul.f32 %v469, %v469
      %v534 = vmul.f32 %v470, %v470
      %v535 = vmul.f32 %v471, %v471
      %v536 = vadd.f32 %v472, %v488
      %v537 = vadd.f32 %v536, %v504
      %v538 = vadd.f32 %v537, %v520
      %v539 = vrot.slane %v538, 4
      %v540 = vadd.f32 %v538, %v539
      %v541 = vrot.slane %v540, 2
      %v542 = vadd.f32 %v540, %v541
      %v543 = vrot.slane %v542, 1
      %v544 = vadd.f32 %v542, %v543
      %v545 = vadd.f32 %v473, %v489
      %v546 = vadd.f32 %v545, %v505
      %v547 = vadd.f32 %v546, %v521
      %v548 = vrot.slane %v547, 4
      %v549 = vadd.f32 %v547, %v548
      %v550 = vrot.slane %v549, 2
      %v551 = vadd.f32 %v549, %v550
      %v552 = vrot.slane %v551, 1
      %v553 = vadd.f32 %v551, %v552
      %v554 = vadd.f32 %v474, %v490
      %v555 = vadd.f32 %v554, %v506
      %v556 = vadd.f32 %v555, %v522
      %v557 = vrot.slane %v556, 4
      %v558 = vadd.f32 %v556, %v557
      %v559 = vrot.slane %v558, 2
      %v560 = vadd.f32 %v558, %v559
      %v561 = vrot.slane %v560, 1
      %v562 = vadd.f32 %v560, %v561
      %v563 = vadd.f32 %v475, %v491
      %v564 = vadd.f32 %v563, %v507
      %v565 = vadd.f32 %v564, %v523
      %v566 = vrot.slane %v565, 4
      %v567 = vadd.f32 %v565, %v566
      %v568 = vrot.slane %v567, 2
      %v569 = vadd.f32 %v567, %v568
      %v570 = vrot.slane %v569, 1
      %v571 = vadd.f32 %v569, %v570
      %v572 = vadd.f32 %v476, %v492
      %v573 = vadd.f32 %v572, %v508
      %v574 = vadd.f32 %v573, %v524
      %v575 = vrot.slane %v574, 4
      %v576 = vadd.f32 %v574, %v575
      %v577 = vrot.slane %v576, 2
      %v578 = vadd.f32 %v576, %v577
      %v579 = vrot.slane %v578, 1
      %v580 = vadd.f32 %v578, %v579
      %v581 = vadd.f32 %v477, %v493
      %v582 = vadd.f32 %v581, %v509
      %v583 = vadd.f32 %v582, %v525
      %v584 = vrot.slane %v583, 4
      %v585 = vadd.f32 %v583, %v584
      %v586 = vrot.slane %v585, 2
      %v587 = vadd.f32 %v585, %v586
      %v588 = vrot.slane %v587, 1
      %v589 = vadd.f32 %v587, %v588
      %v590 = vadd.f32 %v478, %v494
      %v591 = vadd.f32 %v590, %v510
      %v592 = vadd.f32 %v591, %v526
      %v593 = vrot.slane %v592, 4
      %v594 = vadd.f32 %v592, %v593
      %v595 = vrot.slane %v594, 2
      %v596 = vadd.f32 %v594, %v595
      %v597 = vrot.slane %v596, 1
      %v598 = vadd.f32 %v596, %v597
      %v599 = vadd.f32 %v479, %v495
      %v600 = vadd.f32 %v599, %v511
      %v601 = vadd.f32 %v600, %v527
      %v602 = vrot.slane %v601, 4
      %v603 = vadd.f32 %v601, %v602
      %v604 = vrot.slane %v603, 2
      %v605 = vadd.f32 %v603, %v604
      %v606 = vrot.slane %v605, 1
      %v607 = vadd.f32 %v605, %v606
      %v608 = vadd.f32 %v480, %v496
      %v609 = vadd.f32 %v608, %v512
      %v610 = vadd.f32 %v609, %v528
      %v611 = vrot.slane %v610, 4
      %v612 = vadd.f32 %v610, %v611
      %v613 = vrot.slane %v612, 2
      %v614 = vadd.f32 %v612, %v613
      %v615 = vrot.slane %v614, 1
      %v616 = vadd.f32 %v614, %v615
      %v617 = vadd.f32 %v481, %v497
      %v618 = vadd.f32 %v617, %v513
      %v619 = vadd.f32 %v618, %v529
      %v620 = vrot.slane %v619, 4
      %v621 = vadd.f32 %v619, %v620
      %v622 = vrot.slane %v621, 2
      %v623 = vadd.f32 %v621, %v622
      %v624 = vrot.slane %v623, 1
      %v625 = vadd.f32 %v623, %v624
      %v626 = vadd.f32 %v482, %v498
      %v627 = vadd.f32 %v626, %v514
      %v628 = vadd.f32 %v627, %v530
      %v629 = vrot.slane %v628, 4
      %v630 = vadd.f32 %v628, %v629
      %v631 = vrot.slane %v630, 2
      %v632 = vadd.f32 %v630, %v631
      %v633 = vrot.slane %v632, 1
      %v634 = vadd.f32 %v632, %v633
      %v635 = vadd.f32 %v483, %v499
      %v636 = vadd.f32 %v635, %v515
      %v637 = vadd.f32 %v636, %v531
      %v638 = vrot.slane %v637, 4
      %v639 = vadd.f32 %v637, %v638
      %v640 = vrot.slane %v639, 2
      %v641 = vadd.f32 %v639, %v640
      %v642 = vrot.slane %v641, 1
      %v643 = vadd.f32 %v641, %v642
      %v644 = vadd.f32 %v484, %v500
      %v645 = vadd.f32 %v644, %v516
      %v646 = vadd.f32 %v645, %v532
      %v647 = vrot.slane %v646, 4
      %v648 = vadd.f32 %v646, %v647
      %v649 = vrot.slane %v648, 2
      %v650 = vadd.f32 %v648, %v649
      %v651 = vrot.slane %v650, 1
      %v652 = vadd.f32 %v650, %v651
      %v653 = vadd.f32 %v485, %v501
      %v654 = vadd.f32 %v653, %v517
      %v655 = vadd.f32 %v654, %v533
      %v656 = vrot.slane %v655, 4
      %v657 = vadd.f32 %v655, %v656
      %v658 = vrot.slane %v657, 2
      %v659 = vadd.f32 %v657, %v658
      %v660 = vrot.slane %v659, 1
      %v661 = vadd.f32 %v659, %v660
      %v662 = vadd.f32 %v486, %v502
      %v663 = vadd.f32 %v662, %v518
      %v664 = vadd.f32 %v663, %v534
      %v665 = vrot.slane %v664, 4
      %v666 = vadd.f32 %v664, %v665
      %v667 = vrot.slane %v666, 2
      %v668 = vadd.f32 %v666, %v667
      %v669 = vrot.slane %v668, 1
      %v670 = vadd.f32 %v668, %v669
      %v671 = vadd.f32 %v487, %v503
      %v672 = vadd.f32 %v671, %v519
      %v673 = vadd.f32 %v672, %v535
      %v674 = vrot.slane %v673, 4
      %v675 = vadd.f32 %v673, %v674
      %v676 = vrot.slane %v675, 2
      %v677 = vadd.f32 %v675, %v676
      %v678 = vrot.slane %v677, 1
      %v679 = vadd.f32 %v677, %v678
      %v680 = vmul.f32 %v544, %v391
      %v681 = vmul.f32 %v553, %v391
      %v682 = vmul.f32 %v562, %v391
      %v683 = vmul.f32 %v571, %v391
      %v684 = vmul.f32 %v580, %v391
      %v685 = vmul.f32 %v589, %v391
      %v686 = vmul.f32 %v598, %v391
      %v687 = vmul.f32 %v607, %v391
      %v688 = vmul.f32 %v616, %v391
      %v689 = vmul.f32 %v625, %v391
      %v690 = vmul.f32 %v634, %v391
      %v691 = vmul.f32 %v643, %v391
      %v692 = vmul.f32 %v652, %v391
      %v693 = vmul.f32 %v661, %v391
      %v694 = vmul.f32 %v670, %v391
      %v695 = vmul.f32 %v679, %v391
      %v696 = vadd.f32 %v680, 1e-05
      %v697 = vadd.f32 %v681, 1e-05
      %v698 = vadd.f32 %v682, 1e-05
      %v699 = vadd.f32 %v683, 1e-05
      %v700 = vadd.f32 %v684, 1e-05
      %v701 = vadd.f32 %v685, 1e-05
      %v702 = vadd.f32 %v686, 1e-05
      %v703 = vadd.f32 %v687, 1e-05
      %v704 = vadd.f32 %v688, 1e-05
      %v705 = vadd.f32 %v689, 1e-05
      %v706 = vadd.f32 %v690, 1e-05
      %v707 = vadd.f32 %v691, 1e-05
      %v708 = vadd.f32 %v692, 1e-05
      %v709 = vadd.f32 %v693, 1e-05
      %v710 = vadd.f32 %v694, 1e-05
      %v711 = vadd.f32 %v695, 1e-05
      %v712 = vrsqrt.pop %v696
      %v713 = vrsqrt.pop %v697
      %v714 = vrsqrt.pop %v698
      %v715 = vrsqrt.pop %v699
      %v716 = vrsqrt.pop %v700
      %v717 = vrsqrt.pop %v701
      %v718 = vrsqrt.pop %v702
      %v719 = vrsqrt.pop %v703
      %v720 = vrsqrt.pop %v704
      %v721 = vrsqrt.pop %v705
      %v722 = vrsqrt.pop %v706
      %v723 = vrsqrt.pop %v707
      %v724 = vrsqrt.pop %v708
      %v725 = vrsqrt.pop %v709
      %v726 = vrsqrt.pop %v710
      %v727 = vrsqrt.pop %v711
      %v728 = vld [vmem:[%s1] sm:$0xff]
      %v729 = vld [vmem:[%s1 + $0x8] sm:$0xff]
      %v730 = vld [vmem:[%s1 + $0x10] sm:$0xff]
      %v731 = vld [vmem:[%s1 + $0x18] sm:$0xff]
      %v732 = vmul.f32 %v408, %v712
      %v733 = vmul.f32 %v409, %v713
      %v734 = vmul.f32 %v410, %v714
      %v735 = vmul.f32 %v411, %v715
      %v736 = vmul.f32 %v412, %v716
      %v737 = vmul.f32 %v413, %v717
      %v738 = vmul.f32 %v414, %v718
      %v739 = vmul.f32 %v415, %v719
      %v740 = vmul.f32 %v416, %v720
      %v741 = vmul.f32 %v417, %v721
      %v742 = vmul.f32 %v418, %v722
      %v743 = vmul.f32 %v419, %v723
      %v744 = vmul.f32 %v420, %v724
      %v745 = vmul.f32 %v421, %v725
      %v746 = vmul.f32 %v422, %v726
      %v747 = vmul.f32 %v423, %v727
      %v748 = vmul.f32 %v424, %v712
      %v749 = vmul.f32 %v425, %v713
      %v750 = vmul.f32 %v426, %v714
      %v751 = vmul.f32 %v427, %v715
      %v752 = vmul.f32 %v428, %v716
      %v753 = vmul.f32 %v429, %v717
      %v754 = vmul.f32 %v430, %v718
      %v755 = vmul.f32 %v431, %v719
      %v756 = vmul.f32 %v432, %v720
      %v757 = vmul.f32 %v433, %v721
      %v758 = vmul.f32 %v434, %v722
      %v759 = vmul.f32 %v435, %v723
      %v760 = vmul.f32 %v436, %v724
      %v761 = vmul.f32 %v437, %v725
      %v762 = vmul.f32 %v438, %v726
      %v763 = vmul.f32 %v439, %v727
      %v764 = vmul.f32 %v440, %v712
      %v765 = vmul.f32 %v441, %v713
      %v766 = vmul.f32 %v442, %v714
      %v767 = vmul.f32 %v443, %v715
      %v768 = vmul.f32 %v444, %v716
      %v769 = vmul.f32 %v445, %v717
      %v770 = vmul.f32 %v446, %v718
      %v771 = vmul.f32 %v447, %v719
      %v772 = vmul.f32 %v448, %v720
      %v773 = vmul.f32 %v449, %v721
      %v774 = vmul.f32 %v450, %v722
      %v775 = vmul.f32 %v451, %v723
      %v776 = vmul.f32 %v452, %v724
      %v777 = vmul.f32 %v453, %v725
      %v778 = vmul.f32 %v454, %v726
      %v779 = vmul.f32 %v455, %v727
      %v780 = vmul.f32 %v456, %v712
      %v781 = vmul.f32 %v457, %v713
      %v782 = vmul.f32 %v458, %v714
      %v783 = vmul.f32 %v459, %v715
      %v784 = vmul.f32 %v460, %v716
      %v785 = vmul.f32 %v461, %v717
      %v786 = vmul.f32 %v462, %v718
      %v787 = vmul.f32 %v463, %v719
      %v788 = vmul.f32 %v464, %v720
      %v789 = vmul.f32 %v465, %v721
      %v790 = vmul.f32 %v466, %v722
      %v791 = vmul.f32 %v467, %v723
      %v792 = vmul.f32 %v468, %v724
      %v793 = vmul.f32 %v469, %v725
      %v794 = vmul.f32 %v470, %v726
      %v795 = vmul.f32 %v471, %v727
      %797 = vset.pattern.permute.xlu0 0
      %798 = vperm.xlu0 %797, %v728
      %v799 = vpop.permute.xlu0 %798
      %802 = vset.pattern.permute.xlu0 0
      %803 = vperm.xlu0 %802, %v729
      %v804 = vpop.permute.xlu0 %803
      %807 = vset.pattern.permute.xlu0 0
      %808 = vperm.xlu0 %807, %v730
      %v809 = vpop.permute.xlu0 %808
      %812 = vset.pattern.permute.xlu0 0
      %813 = vperm.xlu0 %812, %v731
      %v814 = vpop.permute.xlu0 %813
      %v816 = vmul.f32 %v732, %v799
      %v817 = vmul.f32 %v733, %v799
      %v818 = vmul.f32 %v734, %v799
      %v819 = vmul.f32 %v735, %v799
      %v820 = vmul.f32 %v736, %v799
      %v821 = vmul.f32 %v737, %v799
      %v822 = vmul.f32 %v738, %v799
      %v823 = vmul.f32 %v739, %v799
      %v824 = vmul.f32 %v740, %v799
      %v825 = vmul.f32 %v741, %v799
      %v826 = vmul.f32 %v742, %v799
      %v827 = vmul.f32 %v743, %v799
      %v828 = vmul.f32 %v744, %v799
      %v829 = vmul.f32 %v745, %v799
      %v830 = vmul.f32 %v746, %v799
      %v831 = vmul.f32 %v747, %v799
      %v832 = vmul.f32 %v748, %v804
      %v833 = vmul.f32 %v749, %v804
      %v834 = vmul.f32 %v750, %v804
      %v835 = vmul.f32 %v751, %v804
      %v836 = vmul.f32 %v752, %v804
      %v837 = vmul.f32 %v753, %v804
      %v838 = vmul.f32 %v754, %v804
      %v839 = vmul.f32 %v755, %v804
      %v840 = vmul.f32 %v756, %v804
      %v841 = vmul.f32 %v757, %v804
      %v842 = vmul.f32 %v758, %v804
      %v843 = vmul.f32 %v759, %v804
      %v844 = vmul.f32 %v760, %v804
      %v845 = vmul.f32 %v761, %v804
      %v846 = vmul.f32 %v762, %v804
      %v847 = vmul.f32 %v763, %v804
      %v848 = vmul.f32 %v764, %v809
      %v849 = vmul.f32 %v765, %v809
      %v850 = vmul.f32 %v766, %v809
      %v851 = vmul.f32 %v767, %v809
      %v852 = vmul.f32 %v768, %v809
      %v853 = vmul.f32 %v769, %v809
      %v854 = vmul.f32 %v770, %v809
      %v855 = vmul.f32 %v771, %v809
      %v856 = vmul.f32 %v772, %v809
      %v857 = vmul.f32 %v773, %v809
      %v858 = vmul.f32 %v774, %v809
      %v859 = vmul.f32 %v775, %v809
      %v860 = vmul.f32 %v776, %v809
      %v861 = vmul.f32 %v777, %v809
      %v862 = vmul.f32 %v778, %v809
      %v863 = vmul.f32 %v779, %v809
      %v864 = vmul.f32 %v780, %v814
      %v865 = vmul.f32 %v781, %v814
      %v866 = vmul.f32 %v782, %v814
      %v867 = vmul.f32 %v783, %v814
      %v868 = vmul.f32 %v784, %v814
      %v869 = vmul.f32 %v785, %v814
      %v870 = vmul.f32 %v786, %v814
      %v871 = vmul.f32 %v787, %v814
      %v872 = vmul.f32 %v788, %v814
      %v873 = vmul.f32 %v789, %v814
      %v874 = vmul.f32 %v790, %v814
      %v875 = vmul.f32 %v791, %v814
      %v876 = vmul.f32 %v792, %v814
      %v877 = vmul.f32 %v793, %v814
      %v878 = vmul.f32 %v794, %v814
      %v879 = vmul.f32 %v795, %v814
      %880 = vst [vmem:[%s181] sm:$0xff] %v816
      %881 = vst [vmem:[%s181 + $0x8] sm:$0xff] %v817
      %882 = vst [vmem:[%s181 + $0x10] sm:$0xff] %v818
      %883 = vst [vmem:[%s181 + $0x18] sm:$0xff] %v819
      %884 = vst [vmem:[%s181 + $0x20] sm:$0xff] %v820
      %885 = vst [vmem:[%s181 + $0x28] sm:$0xff] %v821
      %886 = vst [vmem:[%s181 + $0x30] sm:$0xff] %v822
      %887 = vst [vmem:[%s181 + $0x38] sm:$0xff] %v823
      %888 = vst [vmem:[%s181 + $0x40] sm:$0xff] %v824
      %889 = vst [vmem:[%s181 + $0x48] sm:$0xff] %v825
      %890 = vst [vmem:[%s181 + $0x50] sm:$0xff] %v826
      %891 = vst [vmem:[%s181 + $0x58] sm:$0xff] %v827
      %892 = vst [vmem:[%s181 + $0x60] sm:$0xff] %v828
      %893 = vst [vmem:[%s181 + $0x68] sm:$0xff] %v829
      %894 = vst [vmem:[%s181 + $0x70] sm:$0xff] %v830
      %895 = vst [vmem:[%s181 + $0x78] sm:$0xff] %v831
      %896 = vst [vmem:[%s181 + $0x80] sm:$0xff] %v832
      %897 = vst [vmem:[%s181 + $0x88] sm:$0xff] %v833
      %898 = vst [vmem:[%s181 + $0x90] sm:$0xff] %v834
      %899 = vst [vmem:[%s181 + $0x98] sm:$0xff] %v835
      %900 = vst [vmem:[%s181 + $0xa0] sm:$0xff] %v836
      %901 = vst [vmem:[%s181 + $0xa8] sm:$0xff] %v837
      %902 = vst [vmem:[%s181 + $0xb0] sm:$0xff] %v838
      %903 = vst [vmem:[%s181 + $0xb8] sm:$0xff] %v839
      %904 = vst [vmem:[%s181 + $0xc0] sm:$0xff] %v840
      %905 = vst [vmem:[%s181 + $0xc8] sm:$0xff] %v841
      %906 = vst [vmem:[%s181 + $0xd0] sm:$0xff] %v842
      %907 = vst [vmem:[%s181 + $0xd8] sm:$0xff] %v843
      %908 = vst [vmem:[%s181 + $0xe0] sm:$0xff] %v844
      %909 = vst [vmem:[%s181 + $0xe8] sm:$0xff] %v845
      %910 = vst [vmem:[%s181 + $0xf0] sm:$0xff] %v846
      %911 = vst [vmem:[%s181 + $0xf8] sm:$0xff] %v847
      %912 = vst [vmem:[%s181 + $0x100] sm:$0xff] %v848
      %913 = vst [vmem:[%s181 + $0x108] sm:$0xff] %v849
      %914 = vst [vmem:[%s181 + $0x110] sm:$0xff] %v850
      %915 = vst [vmem:[%s181 + $0x118] sm:$0xff] %v851
      %916 = vst [vmem:[%s181 + $0x120] sm:$0xff] %v852
      %917 = vst [vmem:[%s181 + $0x128] sm:$0xff] %v853
      %918 = vst [vmem:[%s181 + $0x130] sm:$0xff] %v854
      %919 = vst [vmem:[%s181 + $0x138] sm:$0xff] %v855
      %920 = vst [vmem:[%s181 + $0x140] sm:$0xff] %v856
      %921 = vst [vmem:[%s181 + $0x148] sm:$0xff] %v857
      %922 = vst [vmem:[%s181 + $0x150] sm:$0xff] %v858
      %923 = vst [vmem:[%s181 + $0x158] sm:$0xff] %v859
      %924 = vst [vmem:[%s181 + $0x160] sm:$0xff] %v860
      %925 = vst [vmem:[%s181 + $0x168] sm:$0xff] %v861
      %926 = vst [vmem:[%s181 + $0x170] sm:$0xff] %v862
      %927 = vst [vmem:[%s181 + $0x178] sm:$0xff] %v863
      %928 = vst [vmem:[%s181 + $0x180] sm:$0xff] %v864
      %929 = vst [vmem:[%s181 + $0x188] sm:$0xff] %v865
      %930 = vst [vmem:[%s181 + $0x190] sm:$0xff] %v866
      %931 = vst [vmem:[%s181 + $0x198] sm:$0xff] %v867
      %932 = vst [vmem:[%s181 + $0x1a0] sm:$0xff] %v868
      %933 = vst [vmem:[%s181 + $0x1a8] sm:$0xff] %v869
      %934 = vst [vmem:[%s181 + $0x1b0] sm:$0xff] %v870
      %935 = vst [vmem:[%s181 + $0x1b8] sm:$0xff] %v871
      %936 = vst [vmem:[%s181 + $0x1c0] sm:$0xff] %v872
      %937 = vst [vmem:[%s181 + $0x1c8] sm:$0xff] %v873
      %938 = vst [vmem:[%s181 + $0x1d0] sm:$0xff] %v874
      %939 = vst [vmem:[%s181 + $0x1d8] sm:$0xff] %v875
      %940 = vst [vmem:[%s181 + $0x1e0] sm:$0xff] %v876
      %941 = vst [vmem:[%s181 + $0x1e8] sm:$0xff] %v877
      %942 = vst [vmem:[%s181 + $0x1f0] sm:$0xff] %v878
      %943 = vst [vmem:[%s181 + $0x1f8] sm:$0xff] %v879
      %s944 = smul.u32 16, %s18
      %p945 = scmp.lt.s32.totalorder %s17, 1
      %s946 = scalar_select %p945, %s17, 1
      %p947 = scmp.lt.s32.totalorder %s944, 15
      %s948 = scalar_select %p947, %s944, 15
      %s949 = smul.addr %s946, 64
      %s950 = sadd.s32 %s948, %s949
      %s951 = smul.addr %s950, 8
      %s952 = scalar_lea.vmem %s2, %s951
      // Predicated region
      $region29: #{layernorm.1} parent=27 // pred_check
        %p953 = pneg %p94
      $region30: #{layernorm.1} parent=27 // pred_check_branch
        %955 = sbr.rel (%p953) target = $region32
      $region31: #{layernorm.1} parent=27 // pred_region
        %s956 = smul.u32 16, %s18
      $region32: #{layernorm.1} parent=27 // pred_fallthru
        _
    $region28: #{layernorm.1} parent=5 // pred_fallthru
      _
    %p957 = scmp.le.s32.totalorder 2, %s8
    // Predicated region
    $region33: #{layernorm.1} parent=5 // pred_check
      %p958 = pneg %p957
    $region34: #{layernorm.1} parent=5 // pred_check_branch
      %960 = sbr.rel (%p958) target = $region36
    $region35: #{layernorm.1} parent=5 // pred_region
      %s961 = ssub.s32 %s8, 2
      // Predicated region
      $region37: #{layernorm.1} parent=35 // pred_check
        %p962 = pneg %p100
      $region38: #{layernorm.1} parent=35 // pred_check_branch
        %964 = sbr.rel (%p962) target = $region40
      $region39: #{layernorm.1} parent=35 // pred_region
        %s965 = smul.u32 16, %s20
        %p966 = scmp.lt.s32.totalorder %s19, 1
        %s967 = scalar_select %p966, %s19, 1
        %p968 = scmp.lt.s32.totalorder %s965, 15
        %s969 = scalar_select %p968, %s965, 15
        %s970 = smul.addr %s967, 64
        %s971 = sadd.s32 %s969, %s970
        %s972 = smul.addr %s971, 8
        %s973 = scalar_lea.vmem %s2, %s972
      $region40: #{layernorm.1} parent=35 // pred_fallthru
        _
    $region36: #{layernorm.1} parent=5 // pred_fallthru
      _
  $region6: #{layernorm.1} parent=0 // loop_footer
    %s12 = sadd.s32 1, %s8
  $region7: #{layernorm.1} parent=0 // loop_footer_branch
    %7 = sbr.rel target = $region3
  $region8: #{layernorm.1} parent=0 // loop_exit
    _

</llo_original>
